<compile_context>
chip_gen: v7x
topology: tpu7x:2x2x1
jax: 0.10.0
libtpu: 0.0.40
codegen_flags: <defaults>
</compile_context>

<pallas_src>
import functools

import jax
import jax.numpy as jnp
from jax.experimental import pallas as pl
from jax.experimental.pallas import tpu as pltpu

IN_DIM = 512
HID = 120
HID_PAD = 128  # lane-aligned hidden width

_V5E_SCOPED_VMEM = 16 * 1024 * 1024  # smallest default scoped-VMEM budget


def net_kernel(x_ref, w1_ref, b1_ref, w2_ref, b2_ref, o_ref):
    # fc1: (TB, 512) f32 @ (512, 128) f32 -> f32, bias + relu.
    h = jnp.dot(x_ref[...], w1_ref[...], preferred_element_type=jnp.float32)
    h = jnp.maximum(h + b1_ref[...], 0.0)
    # fc2 fused with cat([y, -y]): (TB, 128) @ (128, 2) + (1, 2).
    o_ref[...] = (
        jnp.dot(h, w2_ref[...], preferred_element_type=jnp.float32) + b2_ref[...]
    )


def _round_up(n, m):
    return ((n + m - 1) // m) * m


def preprocess_params(w1, b1, w2, b2):
    """One-time weight prep (tiny). Hoisted out of the per-call forward.

    w1: (120, 512), b1: (120,), w2: (1, 120), b2: (1,).
    """
    # fc1: transpose to (512, 120), zero-pad hidden dim to 128.
    w1t = jnp.zeros((IN_DIM, HID_PAD), jnp.float32).at[:, :HID].set(w1.T)
    b1p = jnp.zeros((1, HID_PAD), jnp.float32).at[0, :HID].set(b1)
    # fc2 fused with concat([y, -y]) -> (128, 2) weight, (1, 2) bias.
    w2t = jnp.zeros((HID_PAD, 1), jnp.float32).at[:HID, 0].set(w2[0])
    w2_aug = jnp.concatenate([w2t, -w2t], axis=1)       # (128, 2)
    b2_aug = jnp.concatenate([b2, -b2]).reshape(1, 2)   # (1, 2)
    return w1t, b1p, w2_aug, b2_aug


@jax.jit
def net_forward(x, w1t, b1p, w2_aug, b2_aug):
    """x: (B, 512) f32 -> (B, 2) f32 == cat([fc2(relu(fc1(x))), -fc2(...)], 1)."""
    B = x.shape[0]

    # ---- batch tiling ----
    # At most 2048 rows per tile (4 MiB f32, 8 MiB double-buffered -> fits the
    # 16 MiB v5e scoped-VMEM default with headroom), but no larger than ~B/4
    # (rounded up to the sublane multiple of 8) so large batches produce >= 4
    # grid steps and the parallel axis can be sharded across v7x's two TCs.
    TB = min(2048, _round_up(pl.cdiv(B, 4), 8))
    grid = (pl.cdiv(B, TB),)

    # Document/assert the VMEM budget so future tile bumps don't silently blow
    # past the smallest (v5e) scoped default: 2x x-tile + weights + 2x out-tile.
    weight_bytes = IN_DIM * HID_PAD * 4 + HID_PAD * 4 + HID_PAD * 2 * 4 + 2 * 4
    vmem_bytes = 2 * TB * IN_DIM * 4 + weight_bytes + 2 * TB * 2 * 4
    assert vmem_bytes < _V5E_SCOPED_VMEM

    # Advisory cost: this is a bandwidth op, not a compute op.
    cost = pl.CostEstimate(
        flops=2 * B * IN_DIM * HID_PAD + 2 * B * HID_PAD * 2,
        transcendentals=0,
        bytes_accessed=B * IN_DIM * 4 + weight_bytes + B * 2 * 4,
    )

    out = pl.pallas_call(
        net_kernel,
        out_shape=jax.ShapeDtypeStruct((B, 2), jnp.float32),
        grid=grid,
        in_specs=[
            pl.BlockSpec((TB, IN_DIM), lambda i: (i, 0)),       # x: streamed
            pl.BlockSpec((IN_DIM, HID_PAD), lambda i: (0, 0)),  # w1: resident
            pl.BlockSpec((1, HID_PAD), lambda i: (0, 0)),       # b1: resident
            pl.BlockSpec((HID_PAD, 2), lambda i: (0, 0)),       # w2_aug: resident
            pl.BlockSpec((1, 2), lambda i: (0, 0)),             # b2_aug: resident
        ],
        out_specs=pl.BlockSpec((TB, 2), lambda i: (i, 0)),
        compiler_params=pltpu.CompilerParams(
            dimension_semantics=("parallel",),
        ),
        cost_estimate=cost,
    )(x, w1t, b1p, w2_aug, b2_aug)

    return out


def init_params(key):
    """Deterministic init matching the PyTorch module's parameter shapes."""
    k1, k2, k3, k4 = jax.random.split(key, 4)
    # PyTorch nn.Linear default: U(-1/sqrt(fan_in), 1/sqrt(fan_in))
    bound1 = 1.0 / jnp.sqrt(512.0)
    bound2 = 1.0 / jnp.sqrt(120.0)
    w1 = jax.random.uniform(k1, (HID, IN_DIM), jnp.float32, -bound1, bound1)
    b1 = jax.random.uniform(k2, (HID,), jnp.float32, -bound1, bound1)
    w2 = jax.random.uniform(k3, (1, HID), jnp.float32, -bound2, bound2)
    b2 = jax.random.uniform(k4, (1,), jnp.float32, -bound2, bound2)
    return w1, b1, w2, b2


def _reference(x, w1, b1, w2, b2):
    """Plain-JAX f32 forward matching the PyTorch module."""
    h = jnp.maximum(x @ w1.T + b1, 0.0)
    y = h @ w2.T + b2
    return jnp.concatenate([y, -y], axis=1)


if __name__ == "__main__":
    key = jax.random.PRNGKey(0)
    kx, kp = jax.random.split(key)
    w1, b1, w2, b2 = init_params(kp)
    params = preprocess_params(w1, b1, w2, b2)  # hoisted, done once

    # Small-batch path (single grid step).
    B = 8
    x = jax.random.normal(kx, (B, IN_DIM), jnp.float32)
    out = net_forward(x, *params)
    jax.block_until_ready(out)
    assert out.shape == (B, 2)
    ref = _reference(x, w1, b1, w2, b2)
    assert jnp.allclose(out, ref, atol=1e-3, rtol=1e-3)

    # Ragged-batch path (multiple grid steps + partial last block).
    B2 = 20
    x2 = jax.random.normal(jax.random.fold_in(kx, 1), (B2, IN_DIM), jnp.float32)
    out2 = net_forward(x2, *params)
    jax.block_until_ready(out2)
    assert out2.shape == (B2, 2)
    ref2 = _reference(x2, w1, b1, w2, b2)
    assert jnp.allclose(out2, ref2, atol=1e-3, rtol=1e-3)

    print("KERNEL_OK")
</pallas_src>

<mosaic_0001>
module attributes {stable_mosaic.version = 11 : i64} {
  func.func @net_kernel(%arg0: i32, %arg1: memref<8x512xf32, #tpu.memory_space<vmem>>, %arg2: memref<512x128xf32, #tpu.memory_space<vmem>>, %arg3: memref<1x128xf32, #tpu.memory_space<vmem>>, %arg4: memref<128x2xf32, #tpu.memory_space<vmem>>, %arg5: memref<1x2xf32, #tpu.memory_space<vmem>>, %arg6: memref<8x2xf32, #tpu.memory_space<vmem>>) attributes {dimension_semantics = [#tpu.dimension_semantics<parallel>], iteration_bounds = array<i64: 1>, scalar_prefetch = 0 : i64, scratch_operands = 0 : i64, tpu.core_type = #tpu.core_type<tc>, window_params = [{transform_indices = @transform_0, window_bounds = array<i64: 8, 512>}, {pipeline_mode = #tpu.pipeline_mode<synchronous>, transform_indices = @transform_1, window_bounds = array<i64: 512, 128>}, {pipeline_mode = #tpu.pipeline_mode<synchronous>, transform_indices = @transform_2, window_bounds = array<i64: 1, 128>}, {pipeline_mode = #tpu.pipeline_mode<synchronous>, transform_indices = @transform_3, window_bounds = array<i64: 128, 2>}, {pipeline_mode = #tpu.pipeline_mode<synchronous>, transform_indices = @transform_4, window_bounds = array<i64: 1, 2>}, {transform_indices = @transform_5, window_bounds = array<i64: 8, 2>}]} {
    %c0 = arith.constant 0 : index
    %c0_0 = arith.constant 0 : index
    %0 = vector.load %arg1[%c0, %c0_0] : memref<8x512xf32, #tpu.memory_space<vmem>>, vector<8x512xf32>
    %c0_1 = arith.constant 0 : index
    %c0_2 = arith.constant 0 : index
    %1 = vector.load %arg2[%c0_1, %c0_2] : memref<512x128xf32, #tpu.memory_space<vmem>>, vector<512x128xf32>
    %cst = arith.constant dense<0.000000e+00> : vector<8x128xf32>
    %2 = tpu.matmul %0, %1, %cst {dimension_numbers = #tpu.dot_dimension_numbers<[1], [0], [0], [1], [0, 0, 1, 1], [], []>} : vector<8x512xf32>, vector<512x128xf32>, vector<8x128xf32> -> vector<8x128xf32>
    %c0_3 = arith.constant 0 : index
    %c0_4 = arith.constant 0 : index
    %3 = vector.load %arg3[%c0_3, %c0_4] : memref<1x128xf32, #tpu.memory_space<vmem>>, vector<1x128xf32>
    %4 = vector.broadcast %3 : vector<1x128xf32> to vector<8x128xf32>
    %5 = arith.addf %2, %4 : vector<8x128xf32>
    %cst_5 = arith.constant 0.000000e+00 : f32
    %6 = vector.broadcast %cst_5 : f32 to vector<8x128xf32>
    %7 = arith.maximumf %5, %6 : vector<8x128xf32>
    %c0_6 = arith.constant 0 : index
    %c0_7 = arith.constant 0 : index
    %8 = vector.load %arg4[%c0_6, %c0_7] : memref<128x2xf32, #tpu.memory_space<vmem>>, vector<128x2xf32>
    %cst_8 = arith.constant dense<0.000000e+00> : vector<8x2xf32>
    %9 = tpu.matmul %7, %8, %cst_8 {dimension_numbers = #tpu.dot_dimension_numbers<[1], [0], [0], [1], [0, 0, 1, 1], [], []>} : vector<8x128xf32>, vector<128x2xf32>, vector<8x2xf32> -> vector<8x2xf32>
    %c0_9 = arith.constant 0 : index
    %c0_10 = arith.constant 0 : index
    %10 = vector.load %arg5[%c0_9, %c0_10] : memref<1x2xf32, #tpu.memory_space<vmem>>, vector<1x2xf32>
    %11 = vector.broadcast %10 : vector<1x2xf32> to vector<8x2xf32>
    %12 = arith.addf %9, %11 : vector<8x2xf32>
    %c0_11 = arith.constant 0 : index
    %c0_12 = arith.constant 0 : index
    %13 = vector.load %arg6[%c0_11, %c0_12] : memref<8x2xf32, #tpu.memory_space<vmem>>, vector<8x2xf32>
    tpu.vector_store %arg6[%c0_11, %c0_12], %12 {strides = array<i32>} : memref<8x2xf32, #tpu.memory_space<vmem>>, vector<8x2xf32>,
    return
  }
  func.func @transform_0(%arg0: i32) -> (i32, i32) {
    %c0_i32 = arith.constant 0 : i32
    %c0_i32_0 = arith.constant 0 : i32
    return %arg0, %c0_i32 : i32, i32
  }
  func.func @transform_1(%arg0: i32) -> (i32, i32) {
    %c0_i32 = arith.constant 0 : i32
    %c0_i32_0 = arith.constant 0 : i32
    %c0_i32_1 = arith.constant 0 : i32
    return %c0_i32, %c0_i32_0 : i32, i32
  }
  func.func @transform_2(%arg0: i32) -> (i32, i32) {
    %c0_i32 = arith.constant 0 : i32
    %c0_i32_0 = arith.constant 0 : i32
    %c0_i32_1 = arith.constant 0 : i32
    return %c0_i32, %c0_i32_0 : i32, i32
  }
  func.func @transform_3(%arg0: i32) -> (i32, i32) {
    %c0_i32 = arith.constant 0 : i32
    %c0_i32_0 = arith.constant 0 : i32
    %c0_i32_1 = arith.constant 0 : i32
    return %c0_i32, %c0_i32_0 : i32, i32
  }
  func.func @transform_4(%arg0: i32) -> (i32, i32) {
    %c0_i32 = arith.constant 0 : i32
    %c0_i32_0 = arith.constant 0 : i32
    %c0_i32_1 = arith.constant 0 : i32
    return %c0_i32, %c0_i32_0 : i32, i32
  }
  func.func @transform_5(%arg0: i32) -> (i32, i32) {
    %c0_i32 = arith.constant 0 : i32
    %c0_i32_0 = arith.constant 0 : i32
    return %arg0, %c0_i32 : i32, i32
  }
}

</mosaic_0001>

<llo_original>
// kernel: net_forward.1
$region0: #{net_forward.1}
  #allocation0 [shape = 'u32[]', space=smem, size = 0x4, offset = 0x4, fixed_abs, tag = 'smem constant byte address 0x4 - core index']
  #allocation1 [shape = 'u32[144,128]{1,0:T(1,128)}', space=vmem, size = 0x12000, scoped, tag = 'internal scratch']
  %s0 = inlined_call_operand.vmem [shape: f32[8,512], index: 0, kind: input, shape index: {}]
  %s1 = inlined_call_operand.hbm [shape: f32[512,128], index: 1, kind: input, shape index: {}]
  %s2 = inlined_call_operand.vmem [shape: f32[1,128], index: 2, kind: input, shape index: {}]
  %s3 = inlined_call_operand.vmem [shape: f32[128,2], index: 3, kind: input, shape index: {}]
  %s4 = inlined_call_operand.vmem [shape: f32[1,2], index: 4, kind: input, shape index: {}]
  %s5 = inlined_call_operand.vmem [shape: f32[8,2], index: 5, kind: output, shape index: {}]
  %s6 = sld [smem:[#allocation0]]
  $region34: #{net_forward.1} parent=0
    _
  %s8 = ssub.s32 1, %s6
  %s9 = scalar_select 0, %s8, %s6
  $region1: #{net_forward.1} parent=0
    #allocation2 [shape = 'u8[262144]{0}', space=vmem, size = 0x40000, scoped, tag = 'input window, operand 1, single buffered']
    #allocation3 [shape = 's32[1]{0}', space=sflag, size = 0x4, scoped, tag = 'scoped memory for net_forward.1']
    %10 = vsyncpa [#allocation3], 0
    // Predicated region
    $region2: #{net_forward.1} parent=1 // pred_check
      _
    $region3: #{net_forward.1} parent=1 // pred_check_branch
      %12 = sbr.rel (0) target = $region5
    $region4: #{net_forward.1} parent=1 // pred_region
      _
    $region5: #{net_forward.1} parent=1 // pred_fallthru
      _
    // Predicated region
    $region6: #{net_forward.1} parent=1 // pred_check
      _
    $region7: #{net_forward.1} parent=1 // pred_check_branch
      %14 = sbr.rel (0) target = $region9
    $region8: #{net_forward.1} parent=1 // pred_region
      %s16 = ssub.s32 8192, 8192
      %17 = vsyncadd [#allocation3], %s16
      %s18 = sshll.u32 [#allocation2], 4
      %s19 = int_to_ptr.vmem [resolvable:$true] %s18
      %24 = dma.hbm_to_vmem [thread:$0]  %s1, 8192, %s19, [#allocation3], 128, 128, 8
    $region9: #{net_forward.1} parent=1 // pred_fallthru
      _
    // Predicated region
    $region10: #{net_forward.1} parent=1 // pred_check
      _
    $region11: #{net_forward.1} parent=1 // pred_check_branch
      %26 = sbr.rel (0) target = $region13
    $region12: #{net_forward.1} parent=1 // pred_region
      _
    $region13: #{net_forward.1} parent=1 // pred_fallthru
      _
    // Predicated region
    $region14: #{net_forward.1} parent=1 // pred_check
      _
    $region15: #{net_forward.1} parent=1 // pred_check_branch
      %28 = sbr.rel (0) target = $region17
    $region16: #{net_forward.1} parent=1 // pred_region
      _
    $region17: #{net_forward.1} parent=1 // pred_fallthru
      _
    // Predicated region
    $region18: #{net_forward.1} parent=1 // pred_check
      _
    $region19: #{net_forward.1} parent=1 // pred_check_branch
      %30 = sbr.rel (0) target = $region21
    $region20: #{net_forward.1} parent=1 // pred_region
      _
    $region21: #{net_forward.1} parent=1 // pred_fallthru
      _
    // Predicated region
    $region22: #{net_forward.1} parent=1 // pred_check
      _
    $region23: #{net_forward.1} parent=1 // pred_check_branch
      %32 = sbr.rel (0) target = $region25
    $region24: #{net_forward.1} parent=1 // pred_region
      %33 = dma.done [#allocation3], 8192
    $region25: #{net_forward.1} parent=1 // pred_fallthru
      _
    %v34 = vld [vmem:[%s0] sm:$0xff]
    %v35 = vld [vmem:[%s0 + $0x8] sm:$0xff]
    %v36 = vld [vmem:[%s0 + $0x10] sm:$0xff]
    %v37 = vld [vmem:[%s0 + $0x18] sm:$0xff]
    %v38 = vld [vmem:[#allocation2] sm:$0xff]
    %v39 = vld [vmem:[#allocation2 + $0x8] sm:$0xff]
    %v40 = vld [vmem:[#allocation2 + $0x10] sm:$0xff]
    %v41 = vld [vmem:[#allocation2 + $0x18] sm:$0xff]
    %v42 = vld [vmem:[#allocation2 + $0x20] sm:$0xff]
    %v43 = vld [vmem:[#allocation2 + $0x28] sm:$0xff]
    %v44 = vld [vmem:[#allocation2 + $0x30] sm:$0xff]
    %v45 = vld [vmem:[#allocation2 + $0x38] sm:$0xff]
    %v46 = vld [vmem:[#allocation2 + $0x40] sm:$0xff]
    %v47 = vld [vmem:[#allocation2 + $0x48] sm:$0xff]
    %v48 = vld [vmem:[#allocation2 + $0x50] sm:$0xff]
    %v49 = vld [vmem:[#allocation2 + $0x58] sm:$0xff]
    %v50 = vld [vmem:[#allocation2 + $0x60] sm:$0xff]
    %v51 = vld [vmem:[#allocation2 + $0x68] sm:$0xff]
    %v52 = vld [vmem:[#allocation2 + $0x70] sm:$0xff]
    %v53 = vld [vmem:[#allocation2 + $0x78] sm:$0xff]
    %v54 = vld [vmem:[#allocation2 + $0x80] sm:$0xff]
    %v55 = vld [vmem:[#allocation2 + $0x88] sm:$0xff]
    %v56 = vld [vmem:[#allocation2 + $0x90] sm:$0xff]
    %v57 = vld [vmem:[#allocation2 + $0x98] sm:$0xff]
    %v58 = vld [vmem:[#allocation2 + $0xa0] sm:$0xff]
    %v59 = vld [vmem:[#allocation2 + $0xa8] sm:$0xff]
    %v60 = vld [vmem:[#allocation2 + $0xb0] sm:$0xff]
    %v61 = vld [vmem:[#allocation2 + $0xb8] sm:$0xff]
    %v62 = vld [vmem:[#allocation2 + $0xc0] sm:$0xff]
    %v63 = vld [vmem:[#allocation2 + $0xc8] sm:$0xff]
    %v64 = vld [vmem:[#allocation2 + $0xd0] sm:$0xff]
    %v65 = vld [vmem:[#allocation2 + $0xd8] sm:$0xff]
    %v66 = vld [vmem:[#allocation2 + $0xe0] sm:$0xff]
    %v67 = vld [vmem:[#allocation2 + $0xe8] sm:$0xff]
    %v68 = vld [vmem:[#allocation2 + $0xf0] sm:$0xff]
    %v69 = vld [vmem:[#allocation2 + $0xf8] sm:$0xff]
    %v70 = vld [vmem:[#allocation2 + $0x100] sm:$0xff]
    %v71 = vld [vmem:[#allocation2 + $0x108] sm:$0xff]
    %v72 = vld [vmem:[#allocation2 + $0x110] sm:$0xff]
    %v73 = vld [vmem:[#allocation2 + $0x118] sm:$0xff]
    %v74 = vld [vmem:[#allocation2 + $0x120] sm:$0xff]
    %v75 = vld [vmem:[#allocation2 + $0x128] sm:$0xff]
    %v76 = vld [vmem:[#allocation2 + $0x130] sm:$0xff]
    %v77 = vld [vmem:[#allocation2 + $0x138] sm:$0xff]
    %v78 = vld [vmem:[#allocation2 + $0x140] sm:$0xff]
    %v79 = vld [vmem:[#allocation2 + $0x148] sm:$0xff]
    %v80 = vld [vmem:[#allocation2 + $0x150] sm:$0xff]
    %v81 = vld [vmem:[#allocation2 + $0x158] sm:$0xff]
    %v82 = vld [vmem:[#allocation2 + $0x160] sm:$0xff]
    %v83 = vld [vmem:[#allocation2 + $0x168] sm:$0xff]
    %v84 = vld [vmem:[#allocation2 + $0x170] sm:$0xff]
    %v85 = vld [vmem:[#allocation2 + $0x178] sm:$0xff]
    %v86 = vld [vmem:[#allocation2 + $0x180] sm:$0xff]
    %v87 = vld [vmem:[#allocation2 + $0x188] sm:$0xff]
    %v88 = vld [vmem:[#allocation2 + $0x190] sm:$0xff]
    %v89 = vld [vmem:[#allocation2 + $0x198] sm:$0xff]
    %v90 = vld [vmem:[#allocation2 + $0x1a0] sm:$0xff]
    %v91 = vld [vmem:[#allocation2 + $0x1a8] sm:$0xff]
    %v92 = vld [vmem:[#allocation2 + $0x1b0] sm:$0xff]
    %v93 = vld [vmem:[#allocation2 + $0x1b8] sm:$0xff]
    %v94 = vld [vmem:[#allocation2 + $0x1c0] sm:$0xff]
    %v95 = vld [vmem:[#allocation2 + $0x1c8] sm:$0xff]
    %v96 = vld [vmem:[#allocation2 + $0x1d0] sm:$0xff]
    %v97 = vld [vmem:[#allocation2 + $0x1d8] sm:$0xff]
    %v98 = vld [vmem:[#allocation2 + $0x1e0] sm:$0xff]
    %v99 = vld [vmem:[#allocation2 + $0x1e8] sm:$0xff]
    %v100 = vld [vmem:[#allocation2 + $0x1f0] sm:$0xff]
    %v101 = vld [vmem:[#allocation2 + $0x1f8] sm:$0xff]
    %v102 = vld [vmem:[%s2] sm:$0x1]
    %v104 = vlaneseq
    %v105 = vshrl.u32 %v104, 7
    %v106 = vsub.s32 0, %v105
    %v107 = vrot.slane %v102, %v106
    %109 = vmatprep.subr.mxu0 0.0
    %110 = vmatpush1.msra.mxu0 %v38
    %111 = vmatprep.subr.mxu0 0.0
    %112 = vmatpush1.msra.mxu0 %v39
    %113 = vmatprep.subr.mxu0 0.0
    %114 = vmatpush1.msra.mxu0 %v40
    %115 = vmatprep.subr.mxu0 0.0
    %116 = vmatpush1.msra.mxu0 %v41
    %117 = vmatprep.subr.mxu0 0.0
    %118 = vmatpush1.msra.mxu0 %v42
    %119 = vmatprep.subr.mxu0 0.0
    %120 = vmatpush1.msra.mxu0 %v43
    %121 = vmatprep.subr.mxu0 0.0
    %122 = vmatpush1.msra.mxu0 %v44
    %123 = vmatprep.subr.mxu0 0.0
    %124 = vmatpush1.msra.mxu0 %v45
    %125 = vmatprep.subr.mxu0 0.0
    %126 = vmatpush1.msra.mxu0 %v46
    %127 = vmatprep.subr.mxu0 0.0
    %128 = vmatpush1.msra.mxu0 %v47
    %129 = vmatprep.subr.mxu0 0.0
    %130 = vmatpush1.msra.mxu0 %v48
    %131 = vmatprep.subr.mxu0 0.0
    %132 = vmatpush1.msra.mxu0 %v49
    %133 = vmatprep.subr.mxu0 0.0
    %134 = vmatpush1.msra.mxu0 %v50
    %135 = vmatprep.subr.mxu0 0.0
    %136 = vmatpush1.msra.mxu0 %v51
    %137 = vmatprep.subr.mxu0 0.0
    %138 = vmatpush1.msra.mxu0 %v52
    %139 = vmatprep.subr.mxu0 0.0
    %140 = vmatpush1.msra.mxu0 %v53
    %141 = vmatprep.subr.mxu0 0.0
    %142 = vmatpush1.msra.mxu0 %v54
    %143 = vmatprep.subr.mxu0 0.0
    %144 = vmatpush1.msra.mxu0 %v55
    %145 = vmatprep.subr.mxu0 0.0
    %146 = vmatpush1.msra.mxu0 %v56
    %147 = vmatprep.subr.mxu0 0.0
    %148 = vmatpush1.msra.mxu0 %v57
    %149 = vmatprep.subr.mxu0 0.0
    %150 = vmatpush1.msra.mxu0 %v58
    %151 = vmatprep.subr.mxu0 0.0
    %152 = vmatpush1.msra.mxu0 %v59
    %153 = vmatprep.subr.mxu0 0.0
    %154 = vmatpush1.msra.mxu0 %v60
    %155 = vmatprep.subr.mxu0 0.0
    %156 = vmatpush1.msra.mxu0 %v61
    %157 = vmatprep.subr.mxu0 0.0
    %158 = vmatpush1.msra.mxu0 %v62
    %159 = vmatprep.subr.mxu0 0.0
    %160 = vmatpush1.msra.mxu0 %v63
    %161 = vmatprep.subr.mxu0 0.0
    %162 = vmatpush1.msra.mxu0 %v64
    %163 = vmatprep.subr.mxu0 0.0
    %164 = vmatpush1.msra.mxu0 %v65
    %165 = vmatprep.subr.mxu0 0.0
    %166 = vmatpush1.msra.mxu0 %v66
    %167 = vmatprep.subr.mxu0 0.0
    %168 = vmatpush1.msra.mxu0 %v67
    %169 = vmatprep.subr.mxu0 0.0
    %170 = vmatpush1.msra.mxu0 %v68
    %171 = vmatprep.subr.mxu0 0.0
    %172 = vmatpush1.msra.mxu0 %v69
    %173 = vmatprep.mubr.f32.mxu0 %v35
    %174 = vmatmul.mubr.f32.gmra.mrb[0].mxu0 %v34
    %v175 = vpop.f32.mrb[0].mxu0
    %v176 = vadd.f32 %v107, %v175
    %v177 = vpop.f32.mrb[0].mxu0
    %178 = vdwg.mxu0
    %179 = vmatprep.subr.mxu0 0.0
    %180 = vmatpush1.msra.mxu0 %v70
    %181 = vmatprep.subr.mxu0 0.0
    %182 = vmatpush1.msra.mxu0 %v71
    %183 = vmatprep.subr.mxu0 0.0
    %184 = vmatpush1.msra.mxu0 %v72
    %185 = vmatprep.subr.mxu0 0.0
    %186 = vmatpush1.msra.mxu0 %v73
    %187 = vmatprep.subr.mxu0 0.0
    %188 = vmatpush1.msra.mxu0 %v74
    %189 = vmatprep.subr.mxu0 0.0
    %190 = vmatpush1.msra.mxu0 %v75
    %191 = vmatprep.subr.mxu0 0.0
    %192 = vmatpush1.msra.mxu0 %v76
    %193 = vmatprep.subr.mxu0 0.0
    %194 = vmatpush1.msra.mxu0 %v77
    %195 = vmatprep.subr.mxu0 0.0
    %196 = vmatpush1.msra.mxu0 %v78
    %197 = vmatprep.subr.mxu0 0.0
    %198 = vmatpush1.msra.mxu0 %v79
    %199 = vmatprep.subr.mxu0 0.0
    %200 = vmatpush1.msra.mxu0 %v80
    %201 = vmatprep.subr.mxu0 0.0
    %202 = vmatpush1.msra.mxu0 %v81
    %203 = vmatprep.subr.mxu0 0.0
    %204 = vmatpush1.msra.mxu0 %v82
    %205 = vmatprep.subr.mxu0 0.0
    %206 = vmatpush1.msra.mxu0 %v83
    %207 = vmatprep.subr.mxu0 0.0
    %208 = vmatpush1.msra.mxu0 %v84
    %209 = vmatprep.subr.mxu0 0.0
    %210 = vmatpush1.msra.mxu0 %v85
    %211 = vmatprep.subr.mxu0 0.0
    %212 = vmatpush1.msra.mxu0 %v86
    %213 = vmatprep.subr.mxu0 0.0
    %214 = vmatpush1.msra.mxu0 %v87
    %215 = vmatprep.subr.mxu0 0.0
    %216 = vmatpush1.msra.mxu0 %v88
    %217 = vmatprep.subr.mxu0 0.0
    %218 = vmatpush1.msra.mxu0 %v89
    %219 = vmatprep.subr.mxu0 0.0
    %220 = vmatpush1.msra.mxu0 %v90
    %221 = vmatprep.subr.mxu0 0.0
    %222 = vmatpush1.msra.mxu0 %v91
    %223 = vmatprep.subr.mxu0 0.0
    %224 = vmatpush1.msra.mxu0 %v92
    %225 = vmatprep.subr.mxu0 0.0
    %226 = vmatpush1.msra.mxu0 %v93
    %227 = vmatprep.subr.mxu0 0.0
    %228 = vmatpush1.msra.mxu0 %v94
    %229 = vmatprep.subr.mxu0 0.0
    %230 = vmatpush1.msra.mxu0 %v95
    %231 = vmatprep.subr.mxu0 0.0
    %232 = vmatpush1.msra.mxu0 %v96
    %233 = vmatprep.subr.mxu0 0.0
    %234 = vmatpush1.msra.mxu0 %v97
    %235 = vmatprep.subr.mxu0 0.0
    %236 = vmatpush1.msra.mxu0 %v98
    %237 = vmatprep.subr.mxu0 0.0
    %238 = vmatpush1.msra.mxu0 %v99
    %239 = vmatprep.subr.mxu0 0.0
    %240 = vmatpush1.msra.mxu0 %v100
    %241 = vmatprep.subr.mxu0 0.0
    %242 = vmatpush1.msra.mxu0 %v101
    %243 = vmatprep.mubr.f32.mxu0 %v37
    %244 = vmatmul.mubr.f32.gmra.mrb[0].mxu0 %v36
    %v245 = vpop.f32.mrb[0].mxu0
    %v246 = vadd.f32 %v176, %v245
    %v247 = vpop.f32.mrb[0].mxu0
    %248 = vdwg.mxu0
    %v249 = vmax.f32 %v246, 0.0
    %v250 = vld [vmem:[%s3] sm:$0xff]
    %v251 = vld [vmem:[%s3 + $0x8] sm:$0xff]
    %v252 = vld [vmem:[%s3 + $0x10] sm:$0xff]
    %v253 = vld [vmem:[%s3 + $0x18] sm:$0xff]
    %v254 = vld [vmem:[%s3 + $0x20] sm:$0xff]
    %v255 = vld [vmem:[%s3 + $0x28] sm:$0xff]
    %v256 = vld [vmem:[%s3 + $0x30] sm:$0xff]
    %v257 = vld [vmem:[%s3 + $0x38] sm:$0xff]
    %v258 = vld [vmem:[%s3 + $0x40] sm:$0xff]
    %v259 = vld [vmem:[%s3 + $0x48] sm:$0xff]
    %v260 = vld [vmem:[%s3 + $0x50] sm:$0xff]
    %v261 = vld [vmem:[%s3 + $0x58] sm:$0xff]
    %v262 = vld [vmem:[%s3 + $0x60] sm:$0xff]
    %v263 = vld [vmem:[%s3 + $0x68] sm:$0xff]
    %v264 = vld [vmem:[%s3 + $0x70] sm:$0xff]
    %v265 = vld [vmem:[%s3 + $0x78] sm:$0xff]
    %v266 = vld [vmem:[%s4] sm:$0x1]
    %v268 = vlaneseq
    %v269 = vshrl.u32 %v268, 7
    %v270 = vsub.s32 0, %v269
    %v271 = vrot.slane %v266, %v270
    %273 = vmatprep.subr.mxu0 0.0
    %274 = vmatpush1.msra.mxu0 %v250
    %275 = vmatprep.subr.mxu0 0.0
    %276 = vmatpush1.msra.mxu0 %v251
    %277 = vmatprep.subr.mxu0 0.0
    %278 = vmatpush1.msra.mxu0 %v252
    %279 = vmatprep.subr.mxu0 0.0
    %280 = vmatpush1.msra.mxu0 %v253
    %281 = vmatprep.subr.mxu0 0.0
    %282 = vmatpush1.msra.mxu0 %v254
    %283 = vmatprep.subr.mxu0 0.0
    %284 = vmatpush1.msra.mxu0 %v255
    %285 = vmatprep.subr.mxu0 0.0
    %286 = vmatpush1.msra.mxu0 %v256
    %287 = vmatprep.subr.mxu0 0.0
    %288 = vmatpush1.msra.mxu0 %v257
    %289 = vmatprep.subr.mxu0 0.0
    %290 = vmatpush1.msra.mxu0 %v258
    %291 = vmatprep.subr.mxu0 0.0
    %292 = vmatpush1.msra.mxu0 %v259
    %293 = vmatprep.subr.mxu0 0.0
    %294 = vmatpush1.msra.mxu0 %v260
    %295 = vmatprep.subr.mxu0 0.0
    %296 = vmatpush1.msra.mxu0 %v261
    %297 = vmatprep.subr.mxu0 0.0
    %298 = vmatpush1.msra.mxu0 %v262
    %299 = vmatprep.subr.mxu0 0.0
    %300 = vmatpush1.msra.mxu0 %v263
    %301 = vmatprep.subr.mxu0 0.0
    %302 = vmatpush1.msra.mxu0 %v264
    %303 = vmatprep.subr.mxu0 0.0
    %304 = vmatpush1.msra.mxu0 %v265
    %305 = vmatprep.subr.mxu0 0.0
    %306 = vmatpush1.msra.mxu0 0.0
    %307 = vmatprep.subr.mxu0 0.0
    %308 = vmatpush1.msra.mxu0 0.0
    %309 = vmatprep.subr.mxu0 0.0
    %310 = vmatpush1.msra.mxu0 0.0
    %311 = vmatprep.subr.mxu0 0.0
    %312 = vmatpush1.msra.mxu0 0.0
    %313 = vmatprep.subr.mxu0 0.0
    %314 = vmatpush1.msra.mxu0 0.0
    %315 = vmatprep.subr.mxu0 0.0
    %316 = vmatpush1.msra.mxu0 0.0
    %317 = vmatprep.subr.mxu0 0.0
    %318 = vmatpush1.msra.mxu0 0.0
    %319 = vmatprep.subr.mxu0 0.0
    %320 = vmatpush1.msra.mxu0 0.0
    %321 = vmatprep.subr.mxu0 0.0
    %322 = vmatpush1.msra.mxu0 0.0
    %323 = vmatprep.subr.mxu0 0.0
    %324 = vmatpush1.msra.mxu0 0.0
    %325 = vmatprep.subr.mxu0 0.0
    %326 = vmatpush1.msra.mxu0 0.0
    %327 = vmatprep.subr.mxu0 0.0
    %328 = vmatpush1.msra.mxu0 0.0
    %329 = vmatprep.subr.mxu0 0.0
    %330 = vmatpush1.msra.mxu0 0.0
    %331 = vmatprep.subr.mxu0 0.0
    %332 = vmatpush1.msra.mxu0 0.0
    %333 = vmatprep.subr.mxu0 0.0
    %334 = vmatpush1.msra.mxu0 0.0
    %335 = vmatprep.subr.mxu0 0.0
    %336 = vmatpush1.msra.mxu0 0.0
    %337 = vmatprep.mubr.f32.mxu0 0.0
    %338 = vmatmul.mubr.f32.gmra.mrb[0].mxu0 %v249
    %v339 = vpop.f32.mrb[0].mxu0
    %v340 = vadd.f32 %v271, %v339
    %v341 = vpop.f32.mrb[0].mxu0
    %342 = vdwg.mxu0
    %vm343 = vcmask 15360
    %344 = vst.msk [vmem:[%s5] sm:$0xff] %vm343, %v340
    // Predicated region
    $region26: #{net_forward.1} parent=1 // pred_check
      _
    $region27: #{net_forward.1} parent=1 // pred_check_branch
      %346 = sbr.rel (0) target = $region29
    $region28: #{net_forward.1} parent=1 // pred_region
      _
    $region29: #{net_forward.1} parent=1 // pred_fallthru
      _
    // Predicated region
    $region30: #{net_forward.1} parent=1 // pred_check
      _
    $region31: #{net_forward.1} parent=1 // pred_check_branch
      %348 = sbr.rel (0) target = $region33
    $region32: #{net_forward.1} parent=1 // pred_region
      _
    $region33: #{net_forward.1} parent=1 // pred_fallthru
      _
    %349 = vsyncpa [#allocation3], 1

</llo_original>
